<compile_context>
chip_gen: v5e
topology: v5e:2x2
jax: 0.10.0
libtpu: 0.0.40
codegen_flags: <defaults>
</compile_context>

<pallas_src>
import functools

import jax
import jax.numpy as jnp
from jax import lax
from jax.experimental import pallas as pl
from jax.experimental.pallas import tpu as pltpu

LANES = 128
SUBLANES = 8
MAX_BLOCK_ROWS = 4096   # multiple of 32 -> int8/bf16 keep packed sublane layout
CHUNK_ROWS = 256        # sub-chunk size bounding intermediate live ranges


def _round_up(x, m):
    return (x + m - 1) // m * m


def _num_tensorcore_splits():
    """2 only on chips with >1 TensorCore per chip (v7x); 1 otherwise."""
    # TODO(synk): on v7x, verify in the trace that both TensorCores actually
    # run ~tiles_per_split steps; if "parallel" silently serializes, switch
    # the leading axis to pltpu.CORE_PARALLEL / pl.core_map(tensorcore mesh).
    try:
        info = pltpu.get_tpu_info()
    except Exception:
        return 1
    for attr in ("num_tensorcores", "tensorcores_per_chip", "num_cores",
                 "cores_per_chip"):
        n = getattr(info, attr, None)
        if n is None:
            continue
        try:
            n = int(n)
        except Exception:
            continue
        if n >= 1:
            return max(1, min(n, 2))
    return 1


def _tile_partial_sum(p_ref, t_ref, w_ref, *, block_rows, chunk_rows,
                      valid_rows):
    """Sum of weights*BCE over the current tile, folded to one (8,128) vreg."""
    n_chunks = block_rows // chunk_rows
    sub = chunk_rows // SUBLANES

    def chunk_body(ci, acc):
        r0 = ci * chunk_rows
        if not isinstance(r0, int):
            r0 = pl.multiple_of(r0, chunk_rows)
        x = p_ref[pl.ds(r0, chunk_rows), :].astype(jnp.float32)
        z = t_ref[pl.ds(r0, chunk_rows), :].astype(jnp.float32)
        w = w_ref[pl.ds(r0, chunk_rows), :].astype(jnp.float32)
        # Numerically stable BCE-with-logits (same formulation torch uses).
        loss = jnp.maximum(x, 0.0) - x * z + jnp.log1p(jnp.exp(-jnp.abs(x)))
        weighted = w * loss
        if valid_rows is not None:
            # Single post-loss select on the last real tile only.  A select
            # (not a multiply) so garbage rows from Pallas block padding can
            # never leak inf/NaN into the sum.
            rows = r0 + lax.broadcasted_iota(jnp.int32, (chunk_rows, 1), 0)
            weighted = jnp.where(rows < valid_rows, weighted, 0.0)
        # Lane-parallel fold: pure VPU adds, no cross-lane XLU work.
        return acc + weighted.reshape(sub, SUBLANES, LANES).sum(axis=0)

    init = jnp.zeros((SUBLANES, LANES), jnp.float32)
    if n_chunks == 1:
        return chunk_body(0, init)
    return lax.fori_loop(0, n_chunks, chunk_body, init, unroll=True)


def _bce_kernel(p_ref, t_ref, w_ref, o_ref, *, block_rows, chunk_rows,
                tiles_per_split, n_tiles, valid_rows_last, grid_padded):
    i = pl.program_id(1)                                  # reduction axis
    tile_id = pl.program_id(0) * tiles_per_split + i

    # Output block is resident across the reduction axis -> per-split vector
    # accumulator in VMEM.  Runs even for a split whose every tile is skipped.
    @pl.when(i == 0)
    def _():
        o_ref[...] = jnp.zeros_like(o_ref)

    def accumulate(valid_rows):
        o_ref[...] += _tile_partial_sum(
            p_ref, t_ref, w_ref, block_rows=block_rows,
            chunk_rows=chunk_rows, valid_rows=valid_rows)

    needs_row_mask = valid_rows_last != block_rows
    if not needs_row_mask and not grid_padded:
        accumulate(None)                      # hot path: no masking, no skips
    else:
        last = n_tiles - 1

        @pl.when(tile_id < last)              # interior tiles: never masked
        def _():
            accumulate(None)

        @pl.when(tile_id == last)             # only the last real tile pays
        def _():
            accumulate(valid_rows_last if needs_row_mask else None)
        # tile_id > last only exists when the grid was padded to a rectangle;
        # its (clamped) DMA is ignored and it contributes nothing.


def pixelwise_bce_entropy_loss(preds, targs, weights):
    assert preds.shape == targs.shape == weights.shape
    if targs.dtype == jnp.bool_:
        targs = targs.astype(jnp.int8)        # 1 B/elem; upcast to f32 in VMEM
    n_elem = preds.size

    # Reshape to lane-dense (rows, 128) streams.  rows is kept a multiple of 8
    # so the in-kernel (rows//8, 8, 128) fold is layout-exact.  Padding only
    # happens when n_elem isn't 1024-aligned; padded elements carry weight 0
    # and contribute exactly 0 to the sum.
    # TODO(synk): a zero-copy lane-ragged path (1-D blocks + in-kernel lane
    # mask) would avoid this rare jnp.pad fallback entirely.
    rows = _round_up(-(-n_elem // LANES), SUBLANES)
    pad = rows * LANES - n_elem

    def _as_rows(a):
        flat = jnp.ravel(a)
        if pad:
            flat = jnp.pad(flat, (0, pad))
        return flat.reshape(rows, LANES)

    p2, t2, w2 = _as_rows(preds), _as_rows(targs), _as_rows(weights)

    block_rows = rows if rows <= MAX_BLOCK_ROWS else MAX_BLOCK_ROWS
    chunk_rows = CHUNK_ROWS if block_rows % CHUNK_ROWS == 0 else block_rows
    n_tiles = pl.cdiv(rows, block_rows)
    valid_rows_last = rows - (n_tiles - 1) * block_rows

    num_splits = _num_tensorcore_splits() if n_tiles > 1 else 1
    tiles_per_split = pl.cdiv(n_tiles, num_splits)
    grid_padded = (num_splits * tiles_per_split) != n_tiles

    kernel = functools.partial(
        _bce_kernel, block_rows=block_rows, chunk_rows=chunk_rows,
        tiles_per_split=tiles_per_split, n_tiles=n_tiles,
        valid_rows_last=valid_rows_last, grid_padded=grid_padded)

    if grid_padded:
        def in_map(c, i):   # clamp: padded grid cells never DMA out of bounds
            return (jnp.minimum(c * tiles_per_split + i, n_tiles - 1), 0)
    else:
        def in_map(c, i):
            return (c * tiles_per_split + i, 0)

    in_spec = pl.BlockSpec((block_rows, LANES), in_map)

    partials = pl.pallas_call(
        kernel,
        out_shape=jax.ShapeDtypeStruct((num_splits, SUBLANES, LANES),
                                       jnp.float32),
        grid_spec=pltpu.PrefetchScalarGridSpec(
            num_scalar_prefetch=0,
            grid=(num_splits, tiles_per_split),
            in_specs=[in_spec, in_spec, in_spec],
            out_specs=pl.BlockSpec((None, SUBLANES, LANES),
                                   lambda c, i: (c, 0, 0)),
        ),
        compiler_params=pltpu.CompilerParams(
            dimension_semantics=("parallel", "arbitrary"),
            vmem_limit_bytes=48 * 1024 * 1024,
        ),
    )(p2, t2, w2)

    # Tiny final cross-lane reduction + mean over the true element count.
    # Note: f32 sequential accumulation per lane can drift vs. a tree
    # reduction for >~1e8 elements; acceptable for a training loss.
    return jnp.sum(partials) * (1.0 / float(n_elem))


def _reference(preds, targs, weights):
    x = preds.astype(jnp.float32)
    z = targs.astype(jnp.float32)
    w = weights.astype(jnp.float32)
    loss = jnp.maximum(x, 0.0) - x * z + jnp.log1p(jnp.exp(-jnp.abs(x)))
    return jnp.mean(w * loss)


if __name__ == "__main__":
    key = jax.random.PRNGKey(0)
    k1, k2, k3 = jax.random.split(key, 3)

    B, C, H, W = 2, 4, 16, 16  # NCHW, like the PyTorch module's inputs
    preds = jax.random.normal(k1, (B, C, H, W), dtype=jnp.float32)
    # Narrow dtypes at the boundary: int8 targets (0/1), bf16 weights.
    targs = (jax.random.uniform(k2, (B, C, H, W)) > 0.5).astype(jnp.int8)
    weights = jax.random.uniform(
        k3, (B, C, H, W), dtype=jnp.float32).astype(jnp.bfloat16)

    out = pixelwise_bce_entropy_loss(preds, targs, weights)
    out = jax.block_until_ready(out)

    ref = _reference(preds, targs, weights)
    assert jnp.allclose(out, ref, rtol=1e-5, atol=1e-6), (out, ref)

    print("KERNEL_OK")
</pallas_src>

<mosaic_0001>
module attributes {stable_mosaic.version = 11 : i64} {
  func.func @_bce_kernel(%arg0: i32, %arg1: i32, %arg2: memref<16x128xf32, #tpu.memory_space<vmem>>, %arg3: memref<16x128xi8, #tpu.memory_space<vmem>>, %arg4: memref<16x128xbf16, #tpu.memory_space<vmem>>, %arg5: memref<1x8x128xf32, #tpu.memory_space<vmem>>) attributes {dimension_semantics = [#tpu.dimension_semantics<parallel>, #tpu.dimension_semantics<arbitrary>], iteration_bounds = array<i64: 1, 1>, scalar_prefetch = 0 : i64, scratch_operands = 0 : i64, tpu.core_type = #tpu.core_type<tc>, window_params = [{transform_indices = @transform_0, window_bounds = array<i64: 16, 128>}, {transform_indices = @transform_1, window_bounds = array<i64: 16, 128>}, {transform_indices = @transform_2, window_bounds = array<i64: 16, 128>}, {transform_indices = @transform_3, window_bounds = array<i64: 1, 8, 128>}]} {
    %c0_i32 = arith.constant 0 : i32
    %0 = arith.cmpi eq, %arg1, %c0_i32 : i32
    %1 = arith.extui %0 : i1 to i32
    %c0_i32_0 = arith.constant 0 : i32
    %2 = arith.cmpi ne, %1, %c0_i32_0 : i32
    scf.if %2 {
      %cst_15 = arith.constant 0.000000e+00 : f32
      %29 = vector.broadcast %cst_15 : f32 to vector<8x128xf32>
      %c0_16 = arith.constant 0 : index
      %c0_17 = arith.constant 0 : index
      %c0_18 = arith.constant 0 : index
      %30 = vector.load %arg5[%c0_16, %c0_17, %c0_18] : memref<1x8x128xf32, #tpu.memory_space<vmem>>, vector<1x8x128xf32>
      %31 = vector.shape_cast %30 : vector<1x8x128xf32> to vector<8x128xf32>
      %32 = vector.shape_cast %29 : vector<8x128xf32> to vector<1x8x128xf32>
      tpu.vector_store %arg5[%c0_16, %c0_17, %c0_18], %32 {strides = array<i32>} : memref<1x8x128xf32, #tpu.memory_space<vmem>>, vector<1x8x128xf32>,
    } else {
    }
    %c0 = arith.constant 0 : index
    %c0_1 = arith.constant 0 : index
    %c0_2 = arith.constant 0 : index
    %3 = vector.load %arg5[%c0, %c0_1, %c0_2] : memref<1x8x128xf32, #tpu.memory_space<vmem>>, vector<1x8x128xf32>
    %4 = vector.shape_cast %3 : vector<1x8x128xf32> to vector<8x128xf32>
    %cst = arith.constant 0.000000e+00 : f32
    %5 = vector.broadcast %cst : f32 to vector<8x128xf32>
    %c0_3 = arith.constant 0 : index
    %c0_4 = arith.constant 0 : index
    %6 = vector.load %arg2[%c0_3, %c0_4] : memref<16x128xf32, #tpu.memory_space<vmem>>, vector<16x128xf32>
    %c0_5 = arith.constant 0 : index
    %c0_6 = arith.constant 0 : index
    %7 = vector.load %arg3[%c0_5, %c0_6] : memref<16x128xi8, #tpu.memory_space<vmem>>, vector<16x128xi8>
    %8 = arith.sitofp %7 : vector<16x128xi8> to vector<16x128xf32>
    %c0_7 = arith.constant 0 : index
    %c0_8 = arith.constant 0 : index
    %9 = vector.load %arg4[%c0_7, %c0_8] : memref<16x128xbf16, #tpu.memory_space<vmem>>, vector<16x128xbf16>
    %10 = arith.extf %9 : vector<16x128xbf16> to vector<16x128xf32>
    %cst_9 = arith.constant 0.000000e+00 : f32
    %11 = vector.broadcast %cst_9 : f32 to vector<16x128xf32>
    %12 = arith.maximumf %6, %11 : vector<16x128xf32>
    %13 = arith.mulf %6, %8 : vector<16x128xf32>
    %14 = arith.subf %12, %13 : vector<16x128xf32>
    %15 = math.absf %6 : vector<16x128xf32>
    %cst_10 = arith.constant 0.000000e+00 : f32
    %16 = vector.broadcast %cst_10 : f32 to vector<16x128xf32>
    %17 = arith.subf %16, %15 : vector<16x128xf32>
    %18 = math.exp %17 : vector<16x128xf32>
    %19 = math.log1p %18 : vector<16x128xf32>
    %20 = arith.addf %14, %19 : vector<16x128xf32>
    %21 = arith.mulf %10, %20 : vector<16x128xf32>
    %22 = vector.shape_cast %21 : vector<16x128xf32> to vector<2x8x128xf32>
    %cst_11 = arith.constant dense<0.000000e+00> : vector<8x128xf32>
    %23 = vector.multi_reduction <add>, %22, %cst_11 [0] : vector<2x8x128xf32> to vector<8x128xf32>
    %24 = arith.addf %5, %23 : vector<8x128xf32>
    %25 = arith.addf %4, %24 : vector<8x128xf32>
    %c0_12 = arith.constant 0 : index
    %c0_13 = arith.constant 0 : index
    %c0_14 = arith.constant 0 : index
    %26 = vector.load %arg5[%c0_12, %c0_13, %c0_14] : memref<1x8x128xf32, #tpu.memory_space<vmem>>, vector<1x8x128xf32>
    %27 = vector.shape_cast %26 : vector<1x8x128xf32> to vector<8x128xf32>
    %28 = vector.shape_cast %25 : vector<8x128xf32> to vector<1x8x128xf32>
    tpu.vector_store %arg5[%c0_12, %c0_13, %c0_14], %28 {strides = array<i32>} : memref<1x8x128xf32, #tpu.memory_space<vmem>>, vector<1x8x128xf32>,
    return
  }
  func.func @transform_0(%arg0: i32, %arg1: i32) -> (i32, i32) {
    %c1_i32 = arith.constant 1 : i32
    %0 = arith.muli %arg0, %c1_i32 : i32
    %1 = arith.addi %0, %arg1 : i32
    %c0_i32 = arith.constant 0 : i32
    %c0_i32_0 = arith.constant 0 : i32
    return %1, %c0_i32 : i32, i32
  }
  func.func @transform_1(%arg0: i32, %arg1: i32) -> (i32, i32) {
    %c1_i32 = arith.constant 1 : i32
    %0 = arith.muli %arg0, %c1_i32 : i32
    %1 = arith.addi %0, %arg1 : i32
    %c0_i32 = arith.constant 0 : i32
    %c0_i32_0 = arith.constant 0 : i32
    return %1, %c0_i32 : i32, i32
  }
  func.func @transform_2(%arg0: i32, %arg1: i32) -> (i32, i32) {
    %c1_i32 = arith.constant 1 : i32
    %0 = arith.muli %arg0, %c1_i32 : i32
    %1 = arith.addi %0, %arg1 : i32
    %c0_i32 = arith.constant 0 : i32
    %c0_i32_0 = arith.constant 0 : i32
    return %1, %c0_i32 : i32, i32
  }
  func.func @transform_3(%arg0: i32, %arg1: i32) -> (i32, i32, i32) {
    %c0_i32 = arith.constant 0 : i32
    %c0_i32_0 = arith.constant 0 : i32
    %c0_i32_1 = arith.constant 0 : i32
    return %arg0, %c0_i32, %c0_i32_0 : i32, i32, i32
  }
}

</mosaic_0001>

<llo_original>
// kernel: tpu_custom_call.1
$region0: #{tpu_custom_call.1}
  #allocation0 [shape = 'u32[]', space=smem, size = 0x4, offset = 0x4, fixed_abs, tag = 'smem constant byte address 0x4 - core index']
  #allocation1 [shape = 'u32[72,128]{1,0:T(1,128)}', space=vmem, size = 0x9000, scoped, tag = 'internal scratch']
  %s0 = inlined_call_operand.hbm [shape: f32[16,128], index: 0, kind: input, shape index: {}]
  %s1 = inlined_call_operand.hbm [shape: s8[16,128], index: 1, kind: input, shape index: {}]
  %s2 = inlined_call_operand.hbm [shape: bf16[16,128], index: 2, kind: input, shape index: {}]
  %s3 = inlined_call_operand.hbm [shape: f32[1,8,128], index: 3, kind: output, shape index: {}]
  %s4 = sld [smem:[#allocation0]]
  $region38: #{tpu_custom_call.1} parent=0
    _
  %s6 = ssub.s32 1, %s4
  %s7 = scalar_select 0, %s6, %s4
  $region1: #{tpu_custom_call.1} parent=0
    #allocation2 [shape = 'u8[8192]{0}', space=vmem, size = 0x2000, scoped, tag = 'input window, operand 0, single buffered']
    #allocation3 [shape = 's32[1]{0}', space=sflag, size = 0x4, scoped, tag = 'scoped memory for tpu_custom_call.1']
    #allocation4 [shape = 's32[1]{0}', space=sflag, size = 0x4, scoped, tag = 'scoped memory for tpu_custom_call.1']
    #allocation5 [shape = 'u8[2048]{0}', space=vmem, size = 0x800, scoped, tag = 'input window, operand 1, single buffered']
    #allocation6 [shape = 's32[1]{0}', space=sflag, size = 0x4, scoped, tag = 'scoped memory for tpu_custom_call.1']
    #allocation7 [shape = 'u8[4096]{0}', space=vmem, size = 0x1000, scoped, tag = 'input window, operand 2, single buffered']
    #allocation8 [shape = 'u8[4096]{0}', space=vmem, size = 0x1000, scoped, tag = 'output window, operand 0, single buffered']
    %8 = vsyncpa [#allocation3], 0
    %9 = vsyncpa [#allocation6], 0
    %10 = vsyncpa [#allocation4], 0
    // Predicated region
    $region2: #{tpu_custom_call.1} parent=1 // pred_check
      _
    $region3: #{tpu_custom_call.1} parent=1 // pred_check_branch
      %12 = sbr.rel (0) target = $region5
    $region4: #{tpu_custom_call.1} parent=1 // pred_region
      %s13 = sadd.s32 0, 0
      %s14 = smul.u32 2, %s13
      %16 = vsyncadd [#allocation3], 0
      %s17 = smul.addr %s14, 8
      %s18 = scalar_lea.hbm %s0, %s17
      %s19 = sshll.u32 %s18, 4
      %s20 = int_to_ptr.hbm [resolvable:$true] %s19
      %s21 = sshll.u32 [#allocation2], 4
      %s22 = int_to_ptr.vmem [resolvable:$true] %s21
      %27 = dma.hbm_to_vmem [thread:$0]  %s20, 256, %s22, [#allocation3], 128, 128, 8
    $region5: #{tpu_custom_call.1} parent=1 // pred_fallthru
      _
    // Predicated region
    $region6: #{tpu_custom_call.1} parent=1 // pred_check
      _
    $region7: #{tpu_custom_call.1} parent=1 // pred_check_branch
      %29 = sbr.rel (0) target = $region9
    $region8: #{tpu_custom_call.1} parent=1 // pred_region
      %s30 = sadd.s32 0, 0
      %s31 = smul.u32 2, %s30
      %33 = vsyncadd [#allocation6], 0
      %s34 = smul.addr %s31, 2
      %s35 = scalar_lea.hbm %s1, %s34
      %s36 = sshll.u32 %s35, 4
      %s37 = int_to_ptr.hbm [resolvable:$true] %s36
      %s38 = sshll.u32 [#allocation5], 4
      %s39 = int_to_ptr.vmem [resolvable:$true] %s38
      %44 = dma.hbm_to_vmem [thread:$0]  %s37, 64, %s39, [#allocation6], 32, 32, 2
    $region9: #{tpu_custom_call.1} parent=1 // pred_fallthru
      _
    // Predicated region
    $region10: #{tpu_custom_call.1} parent=1 // pred_check
      _
    $region11: #{tpu_custom_call.1} parent=1 // pred_check_branch
      %46 = sbr.rel (0) target = $region13
    $region12: #{tpu_custom_call.1} parent=1 // pred_region
      %s47 = sadd.s32 0, 0
      %s48 = smul.u32 2, %s47
      %50 = vsyncadd [#allocation6], 0
      %s51 = smul.addr %s48, 4
      %s52 = scalar_lea.hbm %s2, %s51
      %s53 = sshll.u32 %s52, 4
      %s54 = int_to_ptr.hbm [resolvable:$true] %s53
      %s55 = sshll.u32 [#allocation7], 4
      %s56 = int_to_ptr.vmem [resolvable:$true] %s55
      %61 = dma.hbm_to_vmem [thread:$0]  %s54, 128, %s56, [#allocation6], 64, 64, 4
    $region13: #{tpu_custom_call.1} parent=1 // pred_fallthru
      _
    // Predicated region
    $region14: #{tpu_custom_call.1} parent=1 // pred_check
      _
    $region15: #{tpu_custom_call.1} parent=1 // pred_check_branch
      %63 = sbr.rel (0) target = $region17
    $region16: #{tpu_custom_call.1} parent=1 // pred_region
      %65 = dma.done [#allocation3], 256
    $region17: #{tpu_custom_call.1} parent=1 // pred_fallthru
      _
    // Predicated region
    $region18: #{tpu_custom_call.1} parent=1 // pred_check
      _
    $region19: #{tpu_custom_call.1} parent=1 // pred_check_branch
      %67 = sbr.rel (0) target = $region21
    $region20: #{tpu_custom_call.1} parent=1 // pred_region
      %69 = dma.done [#allocation6], 64
    $region21: #{tpu_custom_call.1} parent=1 // pred_fallthru
      _
    // Predicated region
    $region22: #{tpu_custom_call.1} parent=1 // pred_check
      _
    $region23: #{tpu_custom_call.1} parent=1 // pred_check_branch
      %71 = sbr.rel (0) target = $region25
    $region24: #{tpu_custom_call.1} parent=1 // pred_region
      %73 = dma.done [#allocation6], 128
    $region25: #{tpu_custom_call.1} parent=1 // pred_fallthru
      _
    %s74 = sadd.s32 0, 0
    %s75 = smul.u32 2, %s74
    %s76 = sadd.s32 0, 0
    %s77 = smul.u32 2, %s76
    %s78 = sadd.s32 0, 0
    %s79 = smul.u32 2, %s78
    %p80 = scmp.eq.s32.totalorder 0, 0
    // Predicated region
    $region26: #{tpu_custom_call.1} parent=1 // pred_check
      %p81 = pneg %p80
    $region27: #{tpu_custom_call.1} parent=1 // pred_check_branch
      %83 = sbr.rel (%p81) target = $region29
    $region28: #{tpu_custom_call.1} parent=1 // pred_region
      %84 = vst [vmem:[#allocation8] sm:$0xff] 0.0
    $region29: #{tpu_custom_call.1} parent=1 // pred_fallthru
      _
    %v85 = vld [vmem:[#allocation8] sm:$0xff]
    %v86 = vld [vmem:[#allocation2] sm:$0xff]
    %v87 = vld [vmem:[#allocation2 + $0x8] sm:$0xff]
    %v88 = vld [vmem:[#allocation5] sm:$0x3]
    %v89 = vld [vmem:[#allocation5 + $0x2] sm:$0x3]
    %v90 = vunpack.c.0.s8 %v88
    %v91 = vunpack.c.0.s8 %v89
    %v92 = vcvt.s32.f32 %v90
    %v93 = vcvt.s32.f32 %v91
    %v94 = vld [vmem:[#allocation7] sm:$0xf]
    %v95 = vld [vmem:[#allocation7 + $0x4] sm:$0xf]
    %v96 = vunpack.c.l.bf16 %v94
    %v97 = vunpack.c.l.bf16 %v95
    %v98 = vmax.f32 %v86, 0.0
    %v99 = vmax.f32 %v87, 0.0
    %v100 = vmul.f32 %v86, %v92
    %v101 = vmul.f32 %v87, %v93
    %v102 = vsub.f32 %v98, %v100
    %v103 = vsub.f32 %v99, %v101
    %v104 = vand.u32 2147483647, %v86
    %v105 = vand.u32 2147483647, %v87
    %v106 = vsub.f32 0.0, %v104
    %v107 = vsub.f32 0.0, %v105
    %v108 = vmul.f32 %v106, 1.442695
    %v109 = vpow.pop %v108
    %v110 = vmul.f32 %v107, 1.442695
    %v111 = vpow.pop %v110
    %v112 = vadd.f32 %v109, 1.0
    %v113 = vlog2.pop %v112
    %v114 = vmul.f32 %v113, 0.6931472
    %v115 = vmul.f32 -0.5, %v109
    %v116 = vadd.f32 %v115, 1.0
    %v117 = vmul.f32 %v116, %v109
    %v118 = vand.u32 2147483647, %v109
    %vm119 = vcmp.lt.f32.partialorder %v118, 0.0004427343
    %v120 = vsel %vm119, %v117, %v114
    %v121 = vadd.f32 %v111, 1.0
    %v122 = vlog2.pop %v121
    %v123 = vmul.f32 %v122, 0.6931472
    %v124 = vmul.f32 -0.5, %v111
    %v125 = vadd.f32 %v124, 1.0
    %v126 = vmul.f32 %v125, %v111
    %v127 = vand.u32 2147483647, %v111
    %vm128 = vcmp.lt.f32.partialorder %v127, 0.0004427343
    %v129 = vsel %vm128, %v126, %v123
    %v130 = vadd.f32 %v102, %v120
    %v131 = vadd.f32 %v103, %v129
    %v132 = vmul.f32 %v96, %v130
    %v133 = vmul.f32 %v97, %v131
    %v134 = vadd.f32 %v132, %v133
    %v135 = vadd.f32 %v134, 0.0
    %v136 = vadd.f32 %v85, %v135
    %137 = vst [vmem:[#allocation8] sm:$0xff] %v136
    // Predicated region
    $region30: #{tpu_custom_call.1} parent=1 // pred_check
      _
    $region31: #{tpu_custom_call.1} parent=1 // pred_check_branch
      %139 = sbr.rel (0) target = $region33
    $region32: #{tpu_custom_call.1} parent=1 // pred_region
      %141 = vsyncadd [#allocation4], 0
      %s143 = sshll.u32 [#allocation8], 4
      %s144 = int_to_ptr.vmem [resolvable:$true] %s143
      %s145 = sshll.u32 %s3, 4
      %s146 = int_to_ptr.hbm [resolvable:$true] %s145
      %148 = dma.vmem_to_hbm [thread:$0]  %s144, 128, %s146, [#allocation4]
    $region33: #{tpu_custom_call.1} parent=1 // pred_fallthru
      _
    // Predicated region
    $region34: #{tpu_custom_call.1} parent=1 // pred_check
      _
    $region35: #{tpu_custom_call.1} parent=1 // pred_check_branch
      %150 = sbr.rel (0) target = $region37
    $region36: #{tpu_custom_call.1} parent=1 // pred_region
      %152 = dma.done [#allocation4], 128
    $region37: #{tpu_custom_call.1} parent=1 // pred_fallthru
      _
    %153 = vsyncpa [#allocation3], 1
    %154 = vsyncpa [#allocation6], 1
    %155 = vsyncpa [#allocation4], 1

</llo_original>
